<compile_context>
chip_gen: v6e
topology: v6e:2x2x1
jax: 0.10.0
libtpu: 0.0.40
codegen_flags: <defaults>
</compile_context>

<pallas_src>
import functools

import jax
import jax.numpy as jnp
from jax.experimental import pallas as pl
from jax.experimental.pallas import tpu as pltpu


def _round_up(x, m):
    return ((x + m - 1) // m) * m


def _vmem_capacity_bytes():
    """Physical per-core VMEM capacity, with a conservative (v7x-sized) fallback."""
    try:
        info = pltpu.get_tpu_info()
        cap = int(getattr(info, "vmem_capacity_bytes", 0) or 0)
        if cap > 0:
            return cap
    except Exception:
        pass
    return 64 << 20


def _choose_tiles(M, d_pad, dff_pad, cb, ob, tm_req, tk_req, budget):
    """Pick (tm, tk): big row blocks; tk = 128-multiple divisor of dff_pad that fits."""
    m128 = _round_up(M, 128)
    tm = min(_round_up(tm_req, 128), m128)
    # Keep >= 2 row blocks when there are enough rows (v7x megacore sharding).
    if m128 >= 256 and (m128 + tm - 1) // tm < 2:
        tm = _round_up(m128 // 2, 128)

    c = dff_pad // 128
    tk_cands = sorted({dff_pad // n for n in range(1, c + 1) if c % n == 0},
                      reverse=True)
    if tk_req is not None:
        req = _round_up(tk_req, 128)
        filt = [t for t in tk_cands if t <= req]
        tk_cands = filt if filt else [tk_cands[-1]]

    while True:
        # x block + out block (double-buffered) + f32 accumulator scratch.
        fixed = tm * d_pad * (2 * cb + 2 * ob + 4)
        rem = budget - fixed
        tk = None
        for cand in tk_cands:
            # W1 + W2 chunks (double-buffered) + bias chunks.
            if 4 * d_pad * cand * cb + 8 * (cand + d_pad) <= rem:
                tk = cand
                break
        if tk is not None:
            return tm, tk
        if tm <= 128:
            return tm, tk_cands[-1]
        tm = max(128, tm - 128)


def _ffn_kernel(x_ref, w1_ref, b1_ref, w2_ref, b2_ref, o_ref, acc_ref,
                *, rate, train, seed_mix, compute_dtype, tm, tk, dff_pad):
    i = pl.program_id(0)
    k = pl.program_id(1)
    nk = pl.num_programs(1)

    @pl.when(k == 0)
    def _():
        acc_ref[...] = jnp.zeros_like(acc_ref)

    # fc1 chunk: (tm, d_pad) @ (d_pad, tk) + b1_chunk, ReLU in f32.
    h = jnp.dot(x_ref[...], w1_ref[...], preferred_element_type=jnp.float32)
    h = jnp.maximum(h + b1_ref[...], 0.0)

    if train and rate > 0.0:
        # Inverted dropout via a stateless per-element hash (murmur3 finalizer).
        # Pure VPU integer ops -> lowers on TPU and in interpret mode alike; the
        # mask depends only on (seed, global element index), so it is identical
        # for any tiling and uncorrelated across blocks.
        # TODO(synk): distribution-correct only; does not bit-match torch's RNG.
        rows = jax.lax.broadcasted_iota(jnp.int32, h.shape, 0) + i * tm
        cols = jax.lax.broadcasted_iota(jnp.int32, h.shape, 1) + k * tk
        gidx = (rows * dff_pad + cols).astype(jnp.uint32)  # wraps; hash input only
        hsh = gidx ^ jnp.uint32(seed_mix)
        hsh = hsh ^ (hsh >> 16)
        hsh = hsh * jnp.uint32(0x85EBCA6B)
        hsh = hsh ^ (hsh >> 13)
        hsh = hsh * jnp.uint32(0xC2B2AE35)
        hsh = hsh ^ (hsh >> 16)
        bits31 = (hsh >> 1).astype(jnp.int32)          # 31 uniform, non-negative bits
        threshold = jnp.int32(min(int(rate * 2147483648.0), 2147483647))
        h = jnp.where(bits31 >= threshold, h * (1.0 / (1.0 - rate)), 0.0)

    # fc2 partial: (tm, tk) @ (tk, d_pad), accumulated in f32 VMEM scratch.
    acc_ref[...] += jnp.dot(h.astype(compute_dtype), w2_ref[...],
                            preferred_element_type=jnp.float32)

    @pl.when(k == nk - 1)
    def _():
        o_ref[...] = (acc_ref[...] + b2_ref[...]).astype(o_ref.dtype)


def _pad_cast_2d(a, rows, cols, dtype):
    r, c = a.shape
    if (r, c) != (rows, cols):
        a = jnp.pad(a, ((0, rows - r), (0, cols - c)))
    if a.dtype != dtype:
        a = a.astype(dtype)
    return a


def prepare_params(w1, b1, w2, b2, *, compute_dtype=jnp.bfloat16):
    """Pre-pad/cast weights once so repeated calls skip per-call pad/cast HBM traffic."""
    d_model, dff = w1.shape
    d_pad = _round_up(d_model, 128)
    dff_pad = _round_up(dff, 128)
    w1p = _pad_cast_2d(w1, d_pad, dff_pad, compute_dtype)
    w2p = _pad_cast_2d(w2, dff_pad, d_pad, compute_dtype)
    b1p = _pad_cast_2d(b1.reshape(1, -1), 1, dff_pad, jnp.float32)
    b2p = _pad_cast_2d(b2.reshape(1, -1), 1, d_pad, jnp.float32)
    return w1p, b1p, w2p, b2p


def position_wise_ffn(x, w1, b1, w2, b2, *, rate=0.5, train=False, seed=0,
                      tm=512, tk=None, compute_dtype=jnp.bfloat16):
    """x: (batch, seq, d_model). Returns same shape, dtype of x.

    Weights are (in_features, out_features); they may be raw or the pre-padded /
    pre-cast arrays from prepare_params (recommended for repeated calls).
    """
    batch, seq, d_model = x.shape
    dff = w1.shape[1]          # may already be the 128-padded dff
    M = batch * seq

    d_pad = _round_up(max(d_model, w2.shape[1]), 128)
    dff_pad = _round_up(dff, 128)

    cb = jnp.dtype(compute_dtype).itemsize
    ob = jnp.dtype(x.dtype).itemsize

    capacity = _vmem_capacity_bytes()
    budget = max(8 << 20, int(0.8 * capacity) - (6 << 20))
    tm, tk = _choose_tiles(M, d_pad, dff_pad, cb, ob, tm, tk, budget)
    m_pad = _round_up(M, tm)

    x2d = _pad_cast_2d(x.reshape(M, d_model), m_pad, d_pad, compute_dtype)
    w1p = _pad_cast_2d(w1, d_pad, dff_pad, compute_dtype)
    w2p = _pad_cast_2d(w2, dff_pad, d_pad, compute_dtype)
    b1p = _pad_cast_2d(b1.reshape(1, -1), 1, dff_pad, jnp.float32)
    b2p = _pad_cast_2d(b2.reshape(1, -1), 1, d_pad, jnp.float32)

    grid = (m_pad // tm, dff_pad // tk)
    seed_mix = (int(seed) * 0x9E3779B9 + 0x7F4A7C15) & 0xFFFFFFFF
    vmem_limit = max(16 << 20, int(0.9 * capacity))

    kernel = functools.partial(_ffn_kernel, rate=float(rate), train=bool(train),
                               seed_mix=seed_mix, compute_dtype=compute_dtype,
                               tm=tm, tk=tk, dff_pad=dff_pad)

    out2d = pl.pallas_call(
        kernel,
        out_shape=jax.ShapeDtypeStruct((m_pad, d_pad), x.dtype),
        grid_spec=pltpu.PrefetchScalarGridSpec(
            num_scalar_prefetch=0,
            grid=grid,
            in_specs=[
                pl.BlockSpec((tm, d_pad), lambda i, k: (i, 0)),   # x row block
                pl.BlockSpec((d_pad, tk), lambda i, k: (0, k)),   # W1 chunk
                pl.BlockSpec((1, tk), lambda i, k: (0, k)),       # b1 chunk
                pl.BlockSpec((tk, d_pad), lambda i, k: (k, 0)),   # W2 chunk
                pl.BlockSpec((1, d_pad), lambda i, k: (0, 0)),    # b2
            ],
            out_specs=pl.BlockSpec((tm, d_pad), lambda i, k: (i, 0)),
            scratch_shapes=[pltpu.VMEM((tm, d_pad), jnp.float32)],
        ),
        compiler_params=pltpu.CompilerParams(
            dimension_semantics=("parallel", "arbitrary"),
            vmem_limit_bytes=vmem_limit),
    )(x2d, w1p, b1p, w2p, b2p)

    return out2d[:M, :d_model].reshape(batch, seq, d_model)


def init_params(key, d_model, dff):
    """Deterministic init matching nn.Linear's U(-1/sqrt(fan_in), 1/sqrt(fan_in))."""
    k1, k2, k3, k4 = jax.random.split(key, 4)
    lim1 = 1.0 / jnp.sqrt(jnp.float32(d_model))
    lim2 = 1.0 / jnp.sqrt(jnp.float32(dff))
    w1 = jax.random.uniform(k1, (d_model, dff), jnp.float32, -lim1, lim1)
    b1 = jax.random.uniform(k2, (dff,), jnp.float32, -lim1, lim1)
    w2 = jax.random.uniform(k3, (dff, d_model), jnp.float32, -lim2, lim2)
    b2 = jax.random.uniform(k4, (d_model,), jnp.float32, -lim2, lim2)
    return w1, b1, w2, b2


if __name__ == "__main__":
    batch, seq, d_model, dff = 2, 8, 32, 256

    key = jax.random.PRNGKey(0)
    kx, kp = jax.random.split(key)
    x = jax.random.normal(kx, (batch, seq, d_model), jnp.float32)
    w1, b1, w2, b2 = init_params(kp, d_model, dff)

    ref = jnp.maximum(x @ w1 + b1, 0.0) @ w2 + b2

    # Eval-mode, f32 compute; auto-tiling keeps weights VMEM-resident (nk == 1).
    out_f32 = position_wise_ffn(x, w1, b1, w2, b2, rate=0.5, train=False,
                                compute_dtype=jnp.float32)
    out_f32 = jax.block_until_ready(out_f32)
    assert out_f32.shape == (batch, seq, d_model)
    assert jnp.allclose(out_f32, ref, atol=1e-5, rtol=1e-5)

    # Eval-mode bf16 matmuls + f32 accumulation, forcing the dff-streaming
    # reduction path (tk=128 -> 2 chunks) to exercise the accumulator.
    out_bf16 = position_wise_ffn(x, w1, b1, w2, b2, rate=0.5, train=False, tk=128)
    out_bf16 = jax.block_until_ready(out_bf16)
    assert jnp.allclose(out_bf16, ref, atol=1e-1, rtol=1e-1)

    # Pre-padded / pre-cast weights path (per-call pad/cast traffic removed).
    w1p, b1p, w2p, b2p = prepare_params(w1, b1, w2, b2, compute_dtype=jnp.bfloat16)
    out_prep = position_wise_ffn(x, w1p, b1p, w2p, b2p, rate=0.5, train=False)
    out_prep = jax.block_until_ready(out_prep)
    assert jnp.allclose(out_prep, ref, atol=1e-1, rtol=1e-1)

    # Training-mode dropout (distribution-correct, not torch-RNG bit-matched).
    out_tr = position_wise_ffn(x, w1, b1, w2, b2, rate=0.5, train=True, seed=123)
    out_tr = jax.block_until_ready(out_tr)
    assert out_tr.shape == (batch, seq, d_model)
    assert bool(jnp.all(jnp.isfinite(out_tr)))

    # Training with rate=0 must equal eval exactly.
    out_tr0 = position_wise_ffn(x, w1, b1, w2, b2, rate=0.0, train=True,
                                compute_dtype=jnp.float32)
    out_tr0 = jax.block_until_ready(out_tr0)
    assert jnp.allclose(out_tr0, ref, atol=1e-5, rtol=1e-5)

    print("KERNEL_OK")
</pallas_src>

<mosaic_0001>
module attributes {stable_mosaic.version = 11 : i64} {
  func.func @_ffn_kernel(%arg0: i32, %arg1: i32, %arg2: memref<128x128xf32, #tpu.memory_space<vmem>>, %arg3: memref<128x256xf32, #tpu.memory_space<vmem>>, %arg4: memref<1x256xf32, #tpu.memory_space<vmem>>, %arg5: memref<256x128xf32, #tpu.memory_space<vmem>>, %arg6: memref<1x128xf32, #tpu.memory_space<vmem>>, %arg7: memref<128x128xf32, #tpu.memory_space<vmem>>, %arg8: memref<128x128xf32, #tpu.memory_space<vmem>>) attributes {dimension_semantics = [#tpu.dimension_semantics<parallel>, #tpu.dimension_semantics<arbitrary>], iteration_bounds = array<i64: 1, 1>, scalar_prefetch = 0 : i64, scratch_operands = 1 : i64, tpu.core_type = #tpu.core_type<tc>, window_params = [{transform_indices = @transform_0, window_bounds = array<i64: 128, 128>}, {transform_indices = @transform_1, window_bounds = array<i64: 128, 256>}, {transform_indices = @transform_2, window_bounds = array<i64: 1, 256>}, {transform_indices = @transform_3, window_bounds = array<i64: 256, 128>}, {pipeline_mode = #tpu.pipeline_mode<synchronous>, transform_indices = @transform_4, window_bounds = array<i64: 1, 128>}, {transform_indices = @transform_5, window_bounds = array<i64: 128, 128>}]} {
    %c0_i32 = arith.constant 0 : i32
    %0 = arith.cmpi eq, %arg1, %c0_i32 : i32
    %1 = arith.extui %0 : i1 to i32
    %c0_i32_0 = arith.constant 0 : i32
    %2 = arith.cmpi ne, %1, %c0_i32_0 : i32
    scf.if %2 {
      %cst_16 = arith.constant 0.000000e+00 : f32
      %19 = vector.broadcast %cst_16 : f32 to vector<128x128xf32>
      %c0_17 = arith.constant 0 : index
      %c0_18 = arith.constant 0 : index
      %20 = vector.load %arg8[%c0_17, %c0_18] : memref<128x128xf32, #tpu.memory_space<vmem>>, vector<128x128xf32>
      tpu.vector_store %arg8[%c0_17, %c0_18], %19 {strides = array<i32>} : memref<128x128xf32, #tpu.memory_space<vmem>>, vector<128x128xf32>,
    } else {
    }
    %c0 = arith.constant 0 : index
    %c0_1 = arith.constant 0 : index
    %3 = vector.load %arg2[%c0, %c0_1] : memref<128x128xf32, #tpu.memory_space<vmem>>, vector<128x128xf32>
    %c0_2 = arith.constant 0 : index
    %c0_3 = arith.constant 0 : index
    %4 = vector.load %arg3[%c0_2, %c0_3] : memref<128x256xf32, #tpu.memory_space<vmem>>, vector<128x256xf32>
    %cst = arith.constant dense<0.000000e+00> : vector<128x256xf32>
    %5 = tpu.matmul %3, %4, %cst {dimension_numbers = #tpu.dot_dimension_numbers<[1], [0], [0], [1], [0, 0, 1, 1], [], []>} : vector<128x128xf32>, vector<128x256xf32>, vector<128x256xf32> -> vector<128x256xf32>
    %c0_4 = arith.constant 0 : index
    %c0_5 = arith.constant 0 : index
    %6 = vector.load %arg4[%c0_4, %c0_5] : memref<1x256xf32, #tpu.memory_space<vmem>>, vector<1x256xf32>
    %7 = vector.broadcast %6 : vector<1x256xf32> to vector<128x256xf32>
    %8 = arith.addf %5, %7 : vector<128x256xf32>
    %cst_6 = arith.constant 0.000000e+00 : f32
    %9 = vector.broadcast %cst_6 : f32 to vector<128x256xf32>
    %10 = arith.maximumf %8, %9 : vector<128x256xf32>
    %c0_7 = arith.constant 0 : index
    %c0_8 = arith.constant 0 : index
    %11 = vector.load %arg8[%c0_7, %c0_8] : memref<128x128xf32, #tpu.memory_space<vmem>>, vector<128x128xf32>
    %c0_9 = arith.constant 0 : index
    %c0_10 = arith.constant 0 : index
    %12 = vector.load %arg5[%c0_9, %c0_10] : memref<256x128xf32, #tpu.memory_space<vmem>>, vector<256x128xf32>
    %cst_11 = arith.constant dense<0.000000e+00> : vector<128x128xf32>
    %13 = tpu.matmul %10, %12, %cst_11 {dimension_numbers = #tpu.dot_dimension_numbers<[1], [0], [0], [1], [0, 0, 1, 1], [], []>} : vector<128x256xf32>, vector<256x128xf32>, vector<128x128xf32> -> vector<128x128xf32>
    %14 = arith.addf %11, %13 : vector<128x128xf32>
    %c0_12 = arith.constant 0 : index
    %c0_13 = arith.constant 0 : index
    %15 = vector.load %arg8[%c0_12, %c0_13] : memref<128x128xf32, #tpu.memory_space<vmem>>, vector<128x128xf32>
    tpu.vector_store %arg8[%c0_12, %c0_13], %14 {strides = array<i32>} : memref<128x128xf32, #tpu.memory_space<vmem>>, vector<128x128xf32>,
    %c0_i32_14 = arith.constant 0 : i32
    %16 = arith.cmpi eq, %arg1, %c0_i32_14 : i32
    %17 = arith.extui %16 : i1 to i32
    %c0_i32_15 = arith.constant 0 : i32
    %18 = arith.cmpi ne, %17, %c0_i32_15 : i32
    scf.if %18 {
      %c0_16 = arith.constant 0 : index
      %c0_17 = arith.constant 0 : index
      %19 = vector.load %arg8[%c0_16, %c0_17] : memref<128x128xf32, #tpu.memory_space<vmem>>, vector<128x128xf32>
      %c0_18 = arith.constant 0 : index
      %c0_19 = arith.constant 0 : index
      %20 = vector.load %arg6[%c0_18, %c0_19] : memref<1x128xf32, #tpu.memory_space<vmem>>, vector<1x128xf32>
      %21 = vector.broadcast %20 : vector<1x128xf32> to vector<128x128xf32>
      %22 = arith.addf %19, %21 : vector<128x128xf32>
      %c0_20 = arith.constant 0 : index
      %c0_21 = arith.constant 0 : index
      %23 = vector.load %arg7[%c0_20, %c0_21] : memref<128x128xf32, #tpu.memory_space<vmem>>, vector<128x128xf32>
      tpu.vector_store %arg7[%c0_20, %c0_21], %22 {strides = array<i32>} : memref<128x128xf32, #tpu.memory_space<vmem>>, vector<128x128xf32>,
    } else {
    }
    return
  }
  func.func @transform_0(%arg0: i32, %arg1: i32) -> (i32, i32) {
    %c0_i32 = arith.constant 0 : i32
    %c0_i32_0 = arith.constant 0 : i32
    return %arg0, %c0_i32 : i32, i32
  }
  func.func @transform_1(%arg0: i32, %arg1: i32) -> (i32, i32) {
    %c0_i32 = arith.constant 0 : i32
    %c0_i32_0 = arith.constant 0 : i32
    return %c0_i32, %arg1 : i32, i32
  }
  func.func @transform_2(%arg0: i32, %arg1: i32) -> (i32, i32) {
    %c0_i32 = arith.constant 0 : i32
    %c0_i32_0 = arith.constant 0 : i32
    return %c0_i32, %arg1 : i32, i32
  }
  func.func @transform_3(%arg0: i32, %arg1: i32) -> (i32, i32) {
    %c0_i32 = arith.constant 0 : i32
    %c0_i32_0 = arith.constant 0 : i32
    return %arg1, %c0_i32 : i32, i32
  }
  func.func @transform_4(%arg0: i32, %arg1: i32) -> (i32, i32) {
    %c0_i32 = arith.constant 0 : i32
    %c0_i32_0 = arith.constant 0 : i32
    %c0_i32_1 = arith.constant 0 : i32
    return %c0_i32, %c0_i32_0 : i32, i32
  }
  func.func @transform_5(%arg0: i32, %arg1: i32) -> (i32, i32) {
    %c0_i32 = arith.constant 0 : i32
    %c0_i32_0 = arith.constant 0 : i32
    return %arg0, %c0_i32 : i32, i32
  }
}

</mosaic_0001>

<llo_original>
// kernel: tpu_custom_call.1
$region0: #{tpu_custom_call.1}
  #allocation0 [shape = 'u32[]', space=smem, size = 0x4, offset = 0x4, fixed_abs, tag = 'smem constant byte address 0x4 - core index']
  #allocation1 [shape = 'u32[144,128]{1,0:T(1,128)}', space=vmem, size = 0x12000, scoped, tag = 'internal scratch']
  #allocation2 [shape = 'f32[128,128]{1,0:T(8,128)}', space=vmem, size = 0x10000, scoped, tag = 'scratch operand']
  %s0 = inlined_call_operand.hbm [shape: f32[128,128], index: 0, kind: input, shape index: {}]
  %s1 = inlined_call_operand.hbm [shape: f32[128,256], index: 1, kind: input, shape index: {}]
  %s2 = inlined_call_operand.vmem [shape: f32[1,256], index: 2, kind: input, shape index: {}]
  %s3 = inlined_call_operand.hbm [shape: f32[256,128], index: 3, kind: input, shape index: {}]
  %s4 = inlined_call_operand.vmem [shape: f32[1,128], index: 4, kind: input, shape index: {}]
  %s5 = inlined_call_operand.hbm [shape: f32[128,128], index: 5, kind: output, shape index: {}]
  %s6 = sld [smem:[#allocation0]]
  $region50: #{tpu_custom_call.1} parent=0
    _
  %s8 = ssub.s32 1, %s6
  %s9 = scalar_select 0, %s8, %s6
  $region1: #{tpu_custom_call.1} parent=0
    #allocation3 [shape = 'u8[65536]{0}', space=vmem, size = 0x10000, scoped, tag = 'input window, operand 0, single buffered']
    #allocation4 [shape = 's32[1]{0}', space=sflag, size = 0x4, scoped, tag = 'scoped memory for tpu_custom_call.1']
    #allocation5 [shape = 's32[1]{0}', space=sflag, size = 0x4, scoped, tag = 'scoped memory for tpu_custom_call.1']
    #allocation6 [shape = 'u8[131072]{0}', space=vmem, size = 0x20000, scoped, tag = 'input window, operand 1, single buffered']
    #allocation7 [shape = 's32[1]{0}', space=sflag, size = 0x4, scoped, tag = 'scoped memory for tpu_custom_call.1']
    #allocation8 [shape = 'u8[131072]{0}', space=vmem, size = 0x20000, scoped, tag = 'input window, operand 3, single buffered']
    #allocation9 [shape = 'u8[65536]{0}', space=vmem, size = 0x10000, scoped, tag = 'output window, operand 0, single buffered']
    %10 = vsyncpa [#allocation4], 0
    %11 = vsyncpa [#allocation7], 0
    %12 = vsyncpa [#allocation5], 0
    // Predicated region
    $region2: #{tpu_custom_call.1} parent=1 // pred_check
      _
    $region3: #{tpu_custom_call.1} parent=1 // pred_check_branch
      %14 = sbr.rel (0) target = $region5
    $region4: #{tpu_custom_call.1} parent=1 // pred_region
      %s16 = ssub.s32 2048, 2048
      %17 = vsyncadd [#allocation4], %s16
      %s18 = sshll.u32 [#allocation3], 4
      %s19 = int_to_ptr.vmem [resolvable:$true] %s18
      %24 = dma.hbm_to_vmem [thread:$0]  %s0, 2048, %s19, [#allocation4], 128, 128, 8
    $region5: #{tpu_custom_call.1} parent=1 // pred_fallthru
      _
    // Predicated region
    $region6: #{tpu_custom_call.1} parent=1 // pred_check
      _
    $region7: #{tpu_custom_call.1} parent=1 // pred_check_branch
      %26 = sbr.rel (0) target = $region9
    $region8: #{tpu_custom_call.1} parent=1 // pred_region
      %s28 = ssub.s32 4096, 4096
      %29 = vsyncadd [#allocation7], %s28
      %s30 = sshll.u32 [#allocation6], 4
      %s31 = int_to_ptr.vmem [resolvable:$true] %s30
      %36 = dma.hbm_to_vmem [thread:$0]  %s1, 4096, %s31, [#allocation7], 256, 256, 16
    $region9: #{tpu_custom_call.1} parent=1 // pred_fallthru
      _
    // Predicated region
    $region10: #{tpu_custom_call.1} parent=1 // pred_check
      _
    $region11: #{tpu_custom_call.1} parent=1 // pred_check_branch
      %38 = sbr.rel (0) target = $region13
    $region12: #{tpu_custom_call.1} parent=1 // pred_region
      _
    $region13: #{tpu_custom_call.1} parent=1 // pred_fallthru
      _
    // Predicated region
    $region14: #{tpu_custom_call.1} parent=1 // pred_check
      _
    $region15: #{tpu_custom_call.1} parent=1 // pred_check_branch
      %40 = sbr.rel (0) target = $region17
    $region16: #{tpu_custom_call.1} parent=1 // pred_region
      %s42 = ssub.s32 4096, 4096
      %43 = vsyncadd [#allocation7], %s42
      %s44 = sshll.u32 [#allocation8], 4
      %s45 = int_to_ptr.vmem [resolvable:$true] %s44
      %50 = dma.hbm_to_vmem [thread:$0]  %s3, 4096, %s45, [#allocation7], 128, 128, 8
    $region17: #{tpu_custom_call.1} parent=1 // pred_fallthru
      _
    // Predicated region
    $region18: #{tpu_custom_call.1} parent=1 // pred_check
      _
    $region19: #{tpu_custom_call.1} parent=1 // pred_check_branch
      %52 = sbr.rel (0) target = $region21
    $region20: #{tpu_custom_call.1} parent=1 // pred_region
      _
    $region21: #{tpu_custom_call.1} parent=1 // pred_fallthru
      _
    // Predicated region
    $region22: #{tpu_custom_call.1} parent=1 // pred_check
      _
    $region23: #{tpu_custom_call.1} parent=1 // pred_check_branch
      %54 = sbr.rel (0) target = $region25
    $region24: #{tpu_custom_call.1} parent=1 // pred_region
      %55 = dma.done [#allocation4], 2048
    $region25: #{tpu_custom_call.1} parent=1 // pred_fallthru
      _
    // Predicated region
    $region26: #{tpu_custom_call.1} parent=1 // pred_check
      _
    $region27: #{tpu_custom_call.1} parent=1 // pred_check_branch
      %57 = sbr.rel (0) target = $region29
    $region28: #{tpu_custom_call.1} parent=1 // pred_region
      %58 = dma.done [#allocation7], 4096
    $region29: #{tpu_custom_call.1} parent=1 // pred_fallthru
      _
    // Predicated region
    $region30: #{tpu_custom_call.1} parent=1 // pred_check
      _
    $region31: #{tpu_custom_call.1} parent=1 // pred_check_branch
      %60 = sbr.rel (0) target = $region33
    $region32: #{tpu_custom_call.1} parent=1 // pred_region
      %61 = dma.done [#allocation7], 4096
    $region33: #{tpu_custom_call.1} parent=1 // pred_fallthru
      _
    %p62 = scmp.eq.s32.totalorder 0, 0
    // Predicated region
    $region34: #{tpu_custom_call.1} parent=1 // pred_check
      %p63 = pneg %p62
    $region35: #{tpu_custom_call.1} parent=1 // pred_check_branch
      %65 = sbr.rel (%p63) target = $region37
    $region36: #{tpu_custom_call.1} parent=1 // pred_region
      %66 = vst [vmem:[#allocation2] sm:$0xff] 0.0
      %67 = vst [vmem:[#allocation2 + $0x8] sm:$0xff] 0.0
      %68 = vst [vmem:[#allocation2 + $0x10] sm:$0xff] 0.0
      %69 = vst [vmem:[#allocation2 + $0x18] sm:$0xff] 0.0
      %70 = vst [vmem:[#allocation2 + $0x20] sm:$0xff] 0.0
      %71 = vst [vmem:[#allocation2 + $0x28] sm:$0xff] 0.0
      %72 = vst [vmem:[#allocation2 + $0x30] sm:$0xff] 0.0
      %73 = vst [vmem:[#allocation2 + $0x38] sm:$0xff] 0.0
      %74 = vst [vmem:[#allocation2 + $0x40] sm:$0xff] 0.0
      %75 = vst [vmem:[#allocation2 + $0x48] sm:$0xff] 0.0
      %76 = vst [vmem:[#allocation2 + $0x50] sm:$0xff] 0.0
      %77 = vst [vmem:[#allocation2 + $0x58] sm:$0xff] 0.0
      %78 = vst [vmem:[#allocation2 + $0x60] sm:$0xff] 0.0
      %79 = vst [vmem:[#allocation2 + $0x68] sm:$0xff] 0.0
      %80 = vst [vmem:[#allocation2 + $0x70] sm:$0xff] 0.0
      %81 = vst [vmem:[#allocation2 + $0x78] sm:$0xff] 0.0
    $region37: #{tpu_custom_call.1} parent=1 // pred_fallthru
      _
    %v82 = vld [vmem:[#allocation3] sm:$0xff]
    %v83 = vld [vmem:[#allocation3 + $0x8] sm:$0xff]
    %v84 = vld [vmem:[#allocation3 + $0x10] sm:$0xff]
    %v85 = vld [vmem:[#allocation3 + $0x18] sm:$0xff]
    %v86 = vld [vmem:[#allocation3 + $0x20] sm:$0xff]
    %v87 = vld [vmem:[#allocation3 + $0x28] sm:$0xff]
    %v88 = vld [vmem:[#allocation3 + $0x30] sm:$0xff]
    %v89 = vld [vmem:[#allocation3 + $0x38] sm:$0xff]
    %v90 = vld [vmem:[#allocation3 + $0x40] sm:$0xff]
    %v91 = vld [vmem:[#allocation3 + $0x48] sm:$0xff]
    %v92 = vld [vmem:[#allocation3 + $0x50] sm:$0xff]
    %v93 = vld [vmem:[#allocation3 + $0x58] sm:$0xff]
    %v94 = vld [vmem:[#allocation3 + $0x60] sm:$0xff]
    %v95 = vld [vmem:[#allocation3 + $0x68] sm:$0xff]
    %v96 = vld [vmem:[#allocation3 + $0x70] sm:$0xff]
    %v97 = vld [vmem:[#allocation3 + $0x78] sm:$0xff]
    %v98 = vld [vmem:[#allocation6] sm:$0xff]
    %v99 = vld [vmem:[#allocation6 + $0x8] sm:$0xff]
    %v100 = vld [vmem:[#allocation6 + $0x10] sm:$0xff]
    %v101 = vld [vmem:[#allocation6 + $0x18] sm:$0xff]
    %v102 = vld [vmem:[#allocation6 + $0x20] sm:$0xff]
    %v103 = vld [vmem:[#allocation6 + $0x28] sm:$0xff]
    %v104 = vld [vmem:[#allocation6 + $0x30] sm:$0xff]
    %v105 = vld [vmem:[#allocation6 + $0x38] sm:$0xff]
    %v106 = vld [vmem:[#allocation6 + $0x40] sm:$0xff]
    %v107 = vld [vmem:[#allocation6 + $0x48] sm:$0xff]
    %v108 = vld [vmem:[#allocation6 + $0x50] sm:$0xff]
    %v109 = vld [vmem:[#allocation6 + $0x58] sm:$0xff]
    %v110 = vld [vmem:[#allocation6 + $0x60] sm:$0xff]
    %v111 = vld [vmem:[#allocation6 + $0x68] sm:$0xff]
    %v112 = vld [vmem:[#allocation6 + $0x70] sm:$0xff]
    %v113 = vld [vmem:[#allocation6 + $0x78] sm:$0xff]
    %v114 = vld [vmem:[#allocation6 + $0x80] sm:$0xff]
    %v115 = vld [vmem:[#allocation6 + $0x88] sm:$0xff]
    %v116 = vld [vmem:[#allocation6 + $0x90] sm:$0xff]
    %v117 = vld [vmem:[#allocation6 + $0x98] sm:$0xff]
    %v118 = vld [vmem:[#allocation6 + $0xa0] sm:$0xff]
    %v119 = vld [vmem:[#allocation6 + $0xa8] sm:$0xff]
    %v120 = vld [vmem:[#allocation6 + $0xb0] sm:$0xff]
    %v121 = vld [vmem:[#allocation6 + $0xb8] sm:$0xff]
    %v122 = vld [vmem:[#allocation6 + $0xc0] sm:$0xff]
    %v123 = vld [vmem:[#allocation6 + $0xc8] sm:$0xff]
    %v124 = vld [vmem:[#allocation6 + $0xd0] sm:$0xff]
    %v125 = vld [vmem:[#allocation6 + $0xd8] sm:$0xff]
    %v126 = vld [vmem:[#allocation6 + $0xe0] sm:$0xff]
    %v127 = vld [vmem:[#allocation6 + $0xe8] sm:$0xff]
    %v128 = vld [vmem:[#allocation6 + $0xf0] sm:$0xff]
    %v129 = vld [vmem:[#allocation6 + $0xf8] sm:$0xff]
    %v130 = vld [vmem:[%s2] sm:$0x3]
    %v132 = vlaneseq
    %v133 = vshrl.u32 %v132, 7
    %v134 = vsub.s32 0, %v133
    %v135 = vrot.slane %v130, %v134
    %v136 = vlaneseq
    %v137 = vshrl.u32 %v136, 7
    %v138 = vsub.s32 1, %v137
    %v139 = vrot.slane %v130, %v138
    %142 = vmatprep.subr.mxu0 %v129
    %143 = vmatpush1.msra.mxu0 %v128
    %144 = vmatprep.subr.mxu0 %v127
    %145 = vmatpush1.msra.mxu0 %v126
    %146 = vmatprep.subr.mxu0 %v125
    %147 = vmatpush1.msra.mxu0 %v124
    %148 = vmatprep.subr.mxu0 %v123
    %149 = vmatpush1.msra.mxu0 %v122
    %150 = vmatprep.subr.mxu0 %v121
    %151 = vmatpush1.msra.mxu0 %v120
    %152 = vmatprep.subr.mxu0 %v119
    %153 = vmatpush1.msra.mxu0 %v118
    %154 = vmatprep.subr.mxu0 %v117
    %155 = vmatpush1.msra.mxu0 %v116
    %156 = vmatprep.subr.mxu0 %v115
    %157 = vmatpush1.msra.mxu0 %v114
    %158 = vmatprep.subr.mxu0 %v113
    %159 = vmatpush1.msra.mxu0 %v112
    %160 = vmatprep.subr.mxu0 %v111
    %161 = vmatpush1.msra.mxu0 %v110
    %162 = vmatprep.subr.mxu0 %v109
    %163 = vmatpush1.msra.mxu0 %v108
    %164 = vmatprep.subr.mxu0 %v107
    %165 = vmatpush1.msra.mxu0 %v106
    %166 = vmatprep.subr.mxu0 %v105
    %167 = vmatpush1.msra.mxu0 %v104
    %168 = vmatprep.subr.mxu0 %v103
    %169 = vmatpush1.msra.mxu0 %v102
    %170 = vmatprep.subr.mxu0 %v101
    %171 = vmatpush1.msra.mxu0 %v100
    %172 = vmatprep.subr.mxu0 %v99
    %173 = vmatpush1.msra.mxu0 %v98
    %174 = vmatprep.subr.mxu0 0.0
    %175 = vmatpush2.msra.mxu0 0.0
    %176 = vmatprep.subr.mxu0 0.0
    %177 = vmatpush2.msra.mxu0 0.0
    %178 = vmatprep.subr.mxu0 0.0
    %179 = vmatpush2.msra.mxu0 0.0
    %180 = vmatprep.subr.mxu0 0.0
    %181 = vmatpush2.msra.mxu0 0.0
    %182 = vmatprep.subr.mxu0 0.0
    %183 = vmatpush2.msra.mxu0 0.0
    %184 = vmatprep.subr.mxu0 0.0
    %185 = vmatpush2.msra.mxu0 0.0
    %186 = vmatprep.subr.mxu0 0.0
    %187 = vmatpush2.msra.mxu0 0.0
    %188 = vmatprep.subr.mxu0 0.0
    %189 = vmatpush2.msra.mxu0 0.0
    %190 = vmatprep.subr.mxu0 0.0
    %191 = vmatpush2.msra.mxu0 0.0
    %192 = vmatprep.subr.mxu0 0.0
    %193 = vmatpush2.msra.mxu0 0.0
    %194 = vmatprep.subr.mxu0 0.0
    %195 = vmatpush2.msra.mxu0 0.0
    %196 = vmatprep.subr.mxu0 0.0
    %197 = vmatpush2.msra.mxu0 0.0
    %198 = vmatprep.subr.mxu0 0.0
    %199 = vmatpush2.msra.mxu0 0.0
    %200 = vmatprep.subr.mxu0 0.0
    %201 = vmatpush2.msra.mxu0 0.0
    %202 = vmatprep.subr.mxu0 0.0
    %203 = vmatpush2.msra.mxu0 0.0
    %204 = vmatprep.subr.mxu0 0.0
    %205 = vmatpush2.msra.mxu0 0.0
    %206 = vmatprep.mubr.f32.mxu0 0.0
    %207 = vmatmul.mubr.f32.gmra.mxu0 %v82
    %v208 = vpop.f32.mrf.mxu0
    %v209 = vadd.f32 %v135, %v208
    %v210 = vpop.f32.mrf.mxu0
    %v211 = vadd.f32 %v139, %v210
    %212 = vmatprep.mubr.f32.mxu0 0.0
    %213 = vmatmul.mubr.f32.gmra.mxu0 %v83
    %v214 = vpop.f32.mrf.mxu0
    %v215 = vadd.f32 %v135, %v214
    %v216 = vpop.f32.mrf.mxu0
    %v217 = vadd.f32 %v139, %v216
    %218 = vmatprep.mubr.f32.mxu0 0.0
    %219 = vmatmul.mubr.f32.gmra.mxu0 %v84
    %v220 = vpop.f32.mrf.mxu0
    %v221 = vadd.f32 %v135, %v220
    %v222 = vpop.f32.mrf.mxu0
    %v223 = vadd.f32 %v139, %v222
    %224 = vmatprep.mubr.f32.mxu0 0.0
    %225 = vmatmul.mubr.f32.gmra.mxu0 %v85
    %v226 = vpop.f32.mrf.mxu0
    %v227 = vadd.f32 %v135, %v226
    %v228 = vpop.f32.mrf.mxu0
    %v229 = vadd.f32 %v139, %v228
    %230 = vmatprep.mubr.f32.mxu0 0.0
    %231 = vmatmul.mubr.f32.gmra.mxu0 %v86
    %v232 = vpop.f32.mrf.mxu0
    %v233 = vadd.f32 %v135, %v232
    %v234 = vpop.f32.mrf.mxu0
    %v235 = vadd.f32 %v139, %v234
    %236 = vmatprep.mubr.f32.mxu0 0.0
    %237 = vmatmul.mubr.f32.gmra.mxu0 %v87
    %v238 = vpop.f32.mrf.mxu0
    %v239 = vadd.f32 %v135, %v238
    %v240 = vpop.f32.mrf.mxu0
    %v241 = vadd.f32 %v139, %v240
    %242 = vmatprep.mubr.f32.mxu0 0.0
    %243 = vmatmul.mubr.f32.gmra.mxu0 %v88
    %v244 = vpop.f32.mrf.mxu0
    %v245 = vadd.f32 %v135, %v244
    %v246 = vpop.f32.mrf.mxu0
    %v247 = vadd.f32 %v139, %v246
    %248 = vmatprep.mubr.f32.mxu0 0.0
    %249 = vmatmul.mubr.f32.gmra.mxu0 %v89
    %v250 = vpop.f32.mrf.mxu0
    %v251 = vadd.f32 %v135, %v250
    %v252 = vpop.f32.mrf.mxu0
    %v253 = vadd.f32 %v139, %v252
    %254 = vmatprep.mubr.f32.mxu0 0.0
    %255 = vmatmul.mubr.f32.gmra.mxu0 %v90
    %v256 = vpop.f32.mrf.mxu0
    %v257 = vadd.f32 %v135, %v256
    %v258 = vpop.f32.mrf.mxu0
    %v259 = vadd.f32 %v139, %v258
    %260 = vmatprep.mubr.f32.mxu0 0.0
    %261 = vmatmul.mubr.f32.gmra.mxu0 %v91
    %v262 = vpop.f32.mrf.mxu0
    %v263 = vadd.f32 %v135, %v262
    %v264 = vpop.f32.mrf.mxu0
    %v265 = vadd.f32 %v139, %v264
    %266 = vmatprep.mubr.f32.mxu0 0.0
    %267 = vmatmul.mubr.f32.gmra.mxu0 %v92
    %v268 = vpop.f32.mrf.mxu0
    %v269 = vadd.f32 %v135, %v268
    %v270 = vpop.f32.mrf.mxu0
    %v271 = vadd.f32 %v139, %v270
    %272 = vmatprep.mubr.f32.mxu0 0.0
    %273 = vmatmul.mubr.f32.gmra.mxu0 %v93
    %v274 = vpop.f32.mrf.mxu0
    %v275 = vadd.f32 %v135, %v274
    %v276 = vpop.f32.mrf.mxu0
    %v277 = vadd.f32 %v139, %v276
    %278 = vmatprep.mubr.f32.mxu0 0.0
    %279 = vmatmul.mubr.f32.gmra.mxu0 %v94
    %v280 = vpop.f32.mrf.mxu0
    %v281 = vadd.f32 %v135, %v280
    %v282 = vpop.f32.mrf.mxu0
    %v283 = vadd.f32 %v139, %v282
    %284 = vmatprep.mubr.f32.mxu0 0.0
    %285 = vmatmul.mubr.f32.gmra.mxu0 %v95
    %v286 = vpop.f32.mrf.mxu0
    %v287 = vadd.f32 %v135, %v286
    %v288 = vpop.f32.mrf.mxu0
    %v289 = vadd.f32 %v139, %v288
    %290 = vmatprep.mubr.f32.mxu0 0.0
    %291 = vmatmul.mubr.f32.gmra.mxu0 %v96
    %v292 = vpop.f32.mrf.mxu0
    %v293 = vadd.f32 %v135, %v292
    %v294 = vpop.f32.mrf.mxu0
    %v295 = vadd.f32 %v139, %v294
    %296 = vmatprep.mubr.f32.mxu0 0.0
    %297 = vmatmul.mubr.f32.gmra.mxu0 %v97
    %v298 = vpop.f32.mrf.mxu0
    %v299 = vadd.f32 %v135, %v298
    %v300 = vpop.f32.mrf.mxu0
    %v301 = vadd.f32 %v139, %v300
    %302 = vdwg.mxu0
    %v303 = vmax.f32 %v209, 0.0
    %v304 = vmax.f32 %v211, 0.0
    %v305 = vmax.f32 %v215, 0.0
    %v306 = vmax.f32 %v217, 0.0
    %v307 = vmax.f32 %v221, 0.0
    %v308 = vmax.f32 %v223, 0.0
    %v309 = vmax.f32 %v227, 0.0
    %v310 = vmax.f32 %v229, 0.0
    %v311 = vmax.f32 %v233, 0.0
    %v312 = vmax.f32 %v235, 0.0
    %v313 = vmax.f32 %v239, 0.0
    %v314 = vmax.f32 %v241, 0.0
    %v315 = vmax.f32 %v245, 0.0
    %v316 = vmax.f32 %v247, 0.0
    %v317 = vmax.f32 %v251, 0.0
    %v318 = vmax.f32 %v253, 0.0
    %v319 = vmax.f32 %v257, 0.0
    %v320 = vmax.f32 %v259, 0.0
    %v321 = vmax.f32 %v263, 0.0
    %v322 = vmax.f32 %v265, 0.0
    %v323 = vmax.f32 %v269, 0.0
    %v324 = vmax.f32 %v271, 0.0
    %v325 = vmax.f32 %v275, 0.0
    %v326 = vmax.f32 %v277, 0.0
    %v327 = vmax.f32 %v281, 0.0
    %v328 = vmax.f32 %v283, 0.0
    %v329 = vmax.f32 %v287, 0.0
    %v330 = vmax.f32 %v289, 0.0
    %v331 = vmax.f32 %v293, 0.0
    %v332 = vmax.f32 %v295, 0.0
    %v333 = vmax.f32 %v299, 0.0
    %v334 = vmax.f32 %v301, 0.0
    %v335 = vld [vmem:[#allocation2] sm:$0xff]
    %v336 = vld [vmem:[#allocation2 + $0x8] sm:$0xff]
    %v337 = vld [vmem:[#allocation2 + $0x10] sm:$0xff]
    %v338 = vld [vmem:[#allocation2 + $0x18] sm:$0xff]
    %v339 = vld [vmem:[#allocation2 + $0x20] sm:$0xff]
    %v340 = vld [vmem:[#allocation2 + $0x28] sm:$0xff]
    %v341 = vld [vmem:[#allocation2 + $0x30] sm:$0xff]
    %v342 = vld [vmem:[#allocation2 + $0x38] sm:$0xff]
    %v343 = vld [vmem:[#allocation2 + $0x40] sm:$0xff]
    %v344 = vld [vmem:[#allocation2 + $0x48] sm:$0xff]
    %v345 = vld [vmem:[#allocation2 + $0x50] sm:$0xff]
    %v346 = vld [vmem:[#allocation2 + $0x58] sm:$0xff]
    %v347 = vld [vmem:[#allocation2 + $0x60] sm:$0xff]
    %v348 = vld [vmem:[#allocation2 + $0x68] sm:$0xff]
    %v349 = vld [vmem:[#allocation2 + $0x70] sm:$0xff]
    %v350 = vld [vmem:[#allocation2 + $0x78] sm:$0xff]
    %v351 = vld [vmem:[#allocation8] sm:$0xff]
    %v352 = vld [vmem:[#allocation8 + $0x8] sm:$0xff]
    %v353 = vld [vmem:[#allocation8 + $0x10] sm:$0xff]
    %v354 = vld [vmem:[#allocation8 + $0x18] sm:$0xff]
    %v355 = vld [vmem:[#allocation8 + $0x20] sm:$0xff]
    %v356 = vld [vmem:[#allocation8 + $0x28] sm:$0xff]
    %v357 = vld [vmem:[#allocation8 + $0x30] sm:$0xff]
    %v358 = vld [vmem:[#allocation8 + $0x38] sm:$0xff]
    %v359 = vld [vmem:[#allocation8 + $0x40] sm:$0xff]
    %v360 = vld [vmem:[#allocation8 + $0x48] sm:$0xff]
    %v361 = vld [vmem:[#allocation8 + $0x50] sm:$0xff]
    %v362 = vld [vmem:[#allocation8 + $0x58] sm:$0xff]
    %v363 = vld [vmem:[#allocation8 + $0x60] sm:$0xff]
    %v364 = vld [vmem:[#allocation8 + $0x68] sm:$0xff]
    %v365 = vld [vmem:[#allocation8 + $0x70] sm:$0xff]
    %v366 = vld [vmem:[#allocation8 + $0x78] sm:$0xff]
    %v367 = vld [vmem:[#allocation8 + $0x80] sm:$0xff]
    %v368 = vld [vmem:[#allocation8 + $0x88] sm:$0xff]
    %v369 = vld [vmem:[#allocation8 + $0x90] sm:$0xff]
    %v370 = vld [vmem:[#allocation8 + $0x98] sm:$0xff]
    %v371 = vld [vmem:[#allocation8 + $0xa0] sm:$0xff]
    %v372 = vld [vmem:[#allocation8 + $0xa8] sm:$0xff]
    %v373 = vld [vmem:[#allocation8 + $0xb0] sm:$0xff]
    %v374 = vld [vmem:[#allocation8 + $0xb8] sm:$0xff]
    %v375 = vld [vmem:[#allocation8 + $0xc0] sm:$0xff]
    %v376 = vld [vmem:[#allocation8 + $0xc8] sm:$0xff]
    %v377 = vld [vmem:[#allocation8 + $0xd0] sm:$0xff]
    %v378 = vld [vmem:[#allocation8 + $0xd8] sm:$0xff]
    %v379 = vld [vmem:[#allocation8 + $0xe0] sm:$0xff]
    %v380 = vld [vmem:[#allocation8 + $0xe8] sm:$0xff]
    %v381 = vld [vmem:[#allocation8 + $0xf0] sm:$0xff]
    %v382 = vld [vmem:[#allocation8 + $0xf8] sm:$0xff]
    %383 = vmatprep.subr.mxu0 0.0
    %384 = vmatpush1.msra.mxu0 %v366
    %385 = vmatprep.subr.mxu0 0.0
    %386 = vmatpush1.msra.mxu0 %v365
    %387 = vmatprep.subr.mxu0 0.0
    %388 = vmatpush1.msra.mxu0 %v364
    %389 = vmatprep.subr.mxu0 0.0
    %390 = vmatpush1.msra.mxu0 %v363
    %391 = vmatprep.subr.mxu0 0.0
    %392 = vmatpush1.msra.mxu0 %v362
    %393 = vmatprep.subr.mxu0 0.0
    %394 = vmatpush1.msra.mxu0 %v361
    %395 = vmatprep.subr.mxu0 0.0
    %396 = vmatpush1.msra.mxu0 %v360
    %397 = vmatprep.subr.mxu0 0.0
    %398 = vmatpush1.msra.mxu0 %v359
    %399 = vmatprep.subr.mxu0 0.0
    %400 = vmatpush1.msra.mxu0 %v358
    %401 = vmatprep.subr.mxu0 0.0
    %402 = vmatpush1.msra.mxu0 %v357
    %403 = vmatprep.subr.mxu0 0.0
    %404 = vmatpush1.msra.mxu0 %v356
    %405 = vmatprep.subr.mxu0 0.0
    %406 = vmatpush1.msra.mxu0 %v355
    %407 = vmatprep.subr.mxu0 0.0
    %408 = vmatpush1.msra.mxu0 %v354
    %409 = vmatprep.subr.mxu0 0.0
    %410 = vmatpush1.msra.mxu0 %v353
    %411 = vmatprep.subr.mxu0 0.0
    %412 = vmatpush1.msra.mxu0 %v352
    %413 = vmatprep.subr.mxu0 0.0
    %414 = vmatpush1.msra.mxu0 %v351
    %415 = vmatprep.subr.mxu0 0.0
    %416 = vmatpush2.msra.mxu0 %v382
    %417 = vmatprep.subr.mxu0 0.0
    %418 = vmatpush2.msra.mxu0 %v381
    %419 = vmatprep.subr.mxu0 0.0
    %420 = vmatpush2.msra.mxu0 %v380
    %421 = vmatprep.subr.mxu0 0.0
    %422 = vmatpush2.msra.mxu0 %v379
    %423 = vmatprep.subr.mxu0 0.0
    %424 = vmatpush2.msra.mxu0 %v378
    %425 = vmatprep.subr.mxu0 0.0
    %426 = vmatpush2.msra.mxu0 %v377
    %427 = vmatprep.subr.mxu0 0.0
    %428 = vmatpush2.msra.mxu0 %v376
    %429 = vmatprep.subr.mxu0 0.0
    %430 = vmatpush2.msra.mxu0 %v375
    %431 = vmatprep.subr.mxu0 0.0
    %432 = vmatpush2.msra.mxu0 %v374
    %433 = vmatprep.subr.mxu0 0.0
    %434 = vmatpush2.msra.mxu0 %v373
    %435 = vmatprep.subr.mxu0 0.0
    %436 = vmatpush2.msra.mxu0 %v372
    %437 = vmatprep.subr.mxu0 0.0
    %438 = vmatpush2.msra.mxu0 %v371
    %439 = vmatprep.subr.mxu0 0.0
    %440 = vmatpush2.msra.mxu0 %v370
    %441 = vmatprep.subr.mxu0 0.0
    %442 = vmatpush2.msra.mxu0 %v369
    %443 = vmatprep.subr.mxu0 0.0
    %444 = vmatpush2.msra.mxu0 %v368
    %445 = vmatprep.subr.mxu0 0.0
    %446 = vmatpush2.msra.mxu0 %v367
    %447 = vmatprep.mubr.f32.mxu0 %v304
    %448 = vmatmul.mubr.f32.gmra.mxu0 %v303
    %v449 = vpop.f32.mrf.mxu0
    %v450 = vadd.f32 0.0, %v449
    %v451 = vpop.f32.mrf.mxu0
    %452 = vmatprep.mubr.f32.mxu0 %v306
    %453 = vmatmul.mubr.f32.gmra.mxu0 %v305
    %v454 = vpop.f32.mrf.mxu0
    %v455 = vadd.f32 0.0, %v454
    %v456 = vpop.f32.mrf.mxu0
    %457 = vmatprep.mubr.f32.mxu0 %v308
    %458 = vmatmul.mubr.f32.gmra.mxu0 %v307
    %v459 = vpop.f32.mrf.mxu0
    %v460 = vadd.f32 0.0, %v459
    %v461 = vpop.f32.mrf.mxu0
    %462 = vmatprep.mubr.f32.mxu0 %v310
    %463 = vmatmul.mubr.f32.gmra.mxu0 %v309
    %v464 = vpop.f32.mrf.mxu0
    %v465 = vadd.f32 0.0, %v464
    %v466 = vpop.f32.mrf.mxu0
    %467 = vmatprep.mubr.f32.mxu0 %v312
    %468 = vmatmul.mubr.f32.gmra.mxu0 %v311
    %v469 = vpop.f32.mrf.mxu0
    %v470 = vadd.f32 0.0, %v469
    %v471 = vpop.f32.mrf.mxu0
    %472 = vmatprep.mubr.f32.mxu0 %v314
    %473 = vmatmul.mubr.f32.gmra.mxu0 %v313
    %v474 = vpop.f32.mrf.mxu0
    %v475 = vadd.f32 0.0, %v474
    %v476 = vpop.f32.mrf.mxu0
    %477 = vmatprep.mubr.f32.mxu0 %v316
    %478 = vmatmul.mubr.f32.gmra.mxu0 %v315
    %v479 = vpop.f32.mrf.mxu0
    %v480 = vadd.f32 0.0, %v479
    %v481 = vpop.f32.mrf.mxu0
    %482 = vmatprep.mubr.f32.mxu0 %v318
    %483 = vmatmul.mubr.f32.gmra.mxu0 %v317
    %v484 = vpop.f32.mrf.mxu0
    %v485 = vadd.f32 0.0, %v484
    %v486 = vpop.f32.mrf.mxu0
    %487 = vmatprep.mubr.f32.mxu0 %v320
    %488 = vmatmul.mubr.f32.gmra.mxu0 %v319
    %v489 = vpop.f32.mrf.mxu0
    %v490 = vadd.f32 0.0, %v489
    %v491 = vpop.f32.mrf.mxu0
    %492 = vmatprep.mubr.f32.mxu0 %v322
    %493 = vmatmul.mubr.f32.gmra.mxu0 %v321
    %v494 = vpop.f32.mrf.mxu0
    %v495 = vadd.f32 0.0, %v494
    %v496 = vpop.f32.mrf.mxu0
    %497 = vmatprep.mubr.f32.mxu0 %v324
    %498 = vmatmul.mubr.f32.gmra.mxu0 %v323
    %v499 = vpop.f32.mrf.mxu0
    %v500 = vadd.f32 0.0, %v499
    %v501 = vpop.f32.mrf.mxu0
    %502 = vmatprep.mubr.f32.mxu0 %v326
    %503 = vmatmul.mubr.f32.gmra.mxu0 %v325
    %v504 = vpop.f32.mrf.mxu0
    %v505 = vadd.f32 0.0, %v504
    %v506 = vpop.f32.mrf.mxu0
    %507 = vmatprep.mubr.f32.mxu0 %v328
    %508 = vmatmul.mubr.f32.gmra.mxu0 %v327
    %v509 = vpop.f32.mrf.mxu0
    %v510 = vadd.f32 0.0, %v509
    %v511 = vpop.f32.mrf.mxu0
    %512 = vmatprep.mubr.f32.mxu0 %v330
    %513 = vmatmul.mubr.f32.gmra.mxu0 %v329
    %v514 = vpop.f32.mrf.mxu0
    %v515 = vadd.f32 0.0, %v514
    %v516 = vpop.f32.mrf.mxu0
    %517 = vmatprep.mubr.f32.mxu0 %v332
    %518 = vmatmul.mubr.f32.gmra.mxu0 %v331
    %v519 = vpop.f32.mrf.mxu0
    %v520 = vadd.f32 0.0, %v519
    %v521 = vpop.f32.mrf.mxu0
    %522 = vmatprep.mubr.f32.mxu0 %v334
    %523 = vmatmul.mubr.f32.gmra.mxu0 %v333
    %v524 = vpop.f32.mrf.mxu0
    %v525 = vadd.f32 0.0, %v524
    %v526 = vpop.f32.mrf.mxu0
    %527 = vdwg.mxu0
    %v528 = vadd.f32 %v335, %v450
    %v529 = vadd.f32 %v336, %v455
    %v530 = vadd.f32 %v337, %v460
    %v531 = vadd.f32 %v338, %v465
    %v532 = vadd.f32 %v339, %v470
    %v533 = vadd.f32 %v340, %v475
    %v534 = vadd.f32 %v341, %v480
    %v535 = vadd.f32 %v342, %v485
    %v536 = vadd.f32 %v343, %v490
    %v537 = vadd.f32 %v344, %v495
    %v538 = vadd.f32 %v345, %v500
    %v539 = vadd.f32 %v346, %v505
    %v540 = vadd.f32 %v347, %v510
    %v541 = vadd.f32 %v348, %v515
    %v542 = vadd.f32 %v349, %v520
    %v543 = vadd.f32 %v350, %v525
    %544 = vst [vmem:[#allocation2] sm:$0xff] %v528
    %545 = vst [vmem:[#allocation2 + $0x8] sm:$0xff] %v529
    %546 = vst [vmem:[#allocation2 + $0x10] sm:$0xff] %v530
    %547 = vst [vmem:[#allocation2 + $0x18] sm:$0xff] %v531
    %548 = vst [vmem:[#allocation2 + $0x20] sm:$0xff] %v532
    %549 = vst [vmem:[#allocation2 + $0x28] sm:$0xff] %v533
    %550 = vst [vmem:[#allocation2 + $0x30] sm:$0xff] %v534
    %551 = vst [vmem:[#allocation2 + $0x38] sm:$0xff] %v535
    %552 = vst [vmem:[#allocation2 + $0x40] sm:$0xff] %v536
    %553 = vst [vmem:[#allocation2 + $0x48] sm:$0xff] %v537
    %554 = vst [vmem:[#allocation2 + $0x50] sm:$0xff] %v538
    %555 = vst [vmem:[#allocation2 + $0x58] sm:$0xff] %v539
    %556 = vst [vmem:[#allocation2 + $0x60] sm:$0xff] %v540
    %557 = vst [vmem:[#allocation2 + $0x68] sm:$0xff] %v541
    %558 = vst [vmem:[#allocation2 + $0x70] sm:$0xff] %v542
    %559 = vst [vmem:[#allocation2 + $0x78] sm:$0xff] %v543
    // Predicated region
    $region38: #{tpu_custom_call.1} parent=1 // pred_check
      %p560 = pneg %p62
    $region39: #{tpu_custom_call.1} parent=1 // pred_check_branch
      %562 = sbr.rel (%p560) target = $region41
    $region40: #{tpu_custom_call.1} parent=1 // pred_region
      %v563 = vld [vmem:[#allocation2] sm:$0xff]
      %v564 = vld [vmem:[#allocation2 + $0x8] sm:$0xff]
      %v565 = vld [vmem:[#allocation2 + $0x10] sm:$0xff]
      %v566 = vld [vmem:[#allocation2 + $0x18] sm:$0xff]
      %v567 = vld [vmem:[#allocation2 + $0x20] sm:$0xff]
      %v568 = vld [vmem:[#allocation2 + $0x28] sm:$0xff]
      %v569 = vld [vmem:[#allocation2 + $0x30] sm:$0xff]
      %v570 = vld [vmem:[#allocation2 + $0x38] sm:$0xff]
      %v571 = vld [vmem:[#allocation2 + $0x40] sm:$0xff]
      %v572 = vld [vmem:[#allocation2 + $0x48] sm:$0xff]
      %v573 = vld [vmem:[#allocation2 + $0x50] sm:$0xff]
      %v574 = vld [vmem:[#allocation2 + $0x58] sm:$0xff]
      %v575 = vld [vmem:[#allocation2 + $0x60] sm:$0xff]
      %v576 = vld [vmem:[#allocation2 + $0x68] sm:$0xff]
      %v577 = vld [vmem:[#allocation2 + $0x70] sm:$0xff]
      %v578 = vld [vmem:[#allocation2 + $0x78] sm:$0xff]
      %v579 = vld [vmem:[%s4] sm:$0x1]
      %v581 = vlaneseq
      %v582 = vshrl.u32 %v581, 7
      %v583 = vsub.s32 0, %v582
      %v584 = vrot.slane %v579, %v583
      %v586 = vadd.f32 %v563, %v584
      %v587 = vadd.f32 %v564, %v584
      %v588 = vadd.f32 %v565, %v584
      %v589 = vadd.f32 %v566, %v584
      %v590 = vadd.f32 %v567, %v584
      %v591 = vadd.f32 %v568, %v584
      %v592 = vadd.f32 %v569, %v584
      %v593 = vadd.f32 %v570, %v584
      %v594 = vadd.f32 %v571, %v584
      %v595 = vadd.f32 %v572, %v584
      %v596 = vadd.f32 %v573, %v584
      %v597 = vadd.f32 %v574, %v584
      %v598 = vadd.f32 %v575, %v584
      %v599 = vadd.f32 %v576, %v584
      %v600 = vadd.f32 %v577, %v584
      %v601 = vadd.f32 %v578, %v584
      %602 = vst [vmem:[#allocation9] sm:$0xff] %v586
      %603 = vst [vmem:[#allocation9 + $0x8] sm:$0xff] %v587
      %604 = vst [vmem:[#allocation9 + $0x10] sm:$0xff] %v588
      %605 = vst [vmem:[#allocation9 + $0x18] sm:$0xff] %v589
      %606 = vst [vmem:[#allocation9 + $0x20] sm:$0xff] %v590
      %607 = vst [vmem:[#allocation9 + $0x28] sm:$0xff] %v591
      %608 = vst [vmem:[#allocation9 + $0x30] sm:$0xff] %v592
      %609 = vst [vmem:[#allocation9 + $0x38] sm:$0xff] %v593
      %610 = vst [vmem:[#allocation9 + $0x40] sm:$0xff] %v594
      %611 = vst [vmem:[#allocation9 + $0x48] sm:$0xff] %v595
      %612 = vst [vmem:[#allocation9 + $0x50] sm:$0xff] %v596
      %613 = vst [vmem:[#allocation9 + $0x58] sm:$0xff] %v597
      %614 = vst [vmem:[#allocation9 + $0x60] sm:$0xff] %v598
      %615 = vst [vmem:[#allocation9 + $0x68] sm:$0xff] %v599
      %616 = vst [vmem:[#allocation9 + $0x70] sm:$0xff] %v600
      %617 = vst [vmem:[#allocation9 + $0x78] sm:$0xff] %v601
    $region41: #{tpu_custom_call.1} parent=1 // pred_fallthru
      _
    // Predicated region
    $region42: #{tpu_custom_call.1} parent=1 // pred_check
      _
    $region43: #{tpu_custom_call.1} parent=1 // pred_check_branch
      %619 = sbr.rel (0) target = $region45
    $region44: #{tpu_custom_call.1} parent=1 // pred_region
      %s621 = ssub.s32 2048, 2048
      %622 = vsyncadd [#allocation5], %s621
      %s623 = sshll.u32 [#allocation9], 4
      %s624 = int_to_ptr.vmem [resolvable:$true] %s623
      %629 = dma.vmem_to_hbm [thread:$0]  %s624, 2048, %s5, [#allocation5], 128, 128, 8
    $region45: #{tpu_custom_call.1} parent=1 // pred_fallthru
      _
    // Predicated region
    $region46: #{tpu_custom_call.1} parent=1 // pred_check
      _
    $region47: #{tpu_custom_call.1} parent=1 // pred_check_branch
      %631 = sbr.rel (0) target = $region49
    $region48: #{tpu_custom_call.1} parent=1 // pred_region
      %632 = dma.done [#allocation5], 2048
    $region49: #{tpu_custom_call.1} parent=1 // pred_fallthru
      _
    %633 = vsyncpa [#allocation4], 1
    %634 = vsyncpa [#allocation7], 1
    %635 = vsyncpa [#allocation5], 1

</llo_original>
